<compile_context>
chip_gen: v7x
topology: tpu7x:2x2x1
jax: 0.10.0
libtpu: 0.0.40
codegen_flags: <defaults>
</compile_context>

<pallas_src>
import functools

import jax
import jax.numpy as jnp
from jax.experimental import pallas as pl
from jax.experimental.pallas import tpu as pltpu


# ----------------------------------------------------------------------------
# Registry (mirrors fairnr's register_reader / READER_REGISTRY)
# ----------------------------------------------------------------------------
READER_REGISTRY = {}


def register_reader(name):
    def register_reader_cls(cls):
        if name in READER_REGISTRY:
            raise ValueError("Cannot register duplicate module ({})".format(name))
        READER_REGISTRY[name] = cls
        return cls
    return register_reader_cls


# ----------------------------------------------------------------------------
# Constants / helpers
# ----------------------------------------------------------------------------
_LANES = 128                       # vreg lane width: keep last dim lane-dense.
_TARGET_BLOCK_BYTES = 2 << 20      # ~2 MiB per tile (>=85% of HBM copy roofline).
_VMEM_LIMIT_BYTES = 32 << 20       # 2-in + 2-out buffers (~8 MiB) fit with room;
                                   # explicit so v5e's 16 MiB scoped default
                                   # doesn't reject larger tiles.
_SMALL_BYTES = 8 << 20             # below ~8 MiB a standalone pallas_call is a loss.
_DMA_MAX_CHUNKS = 4                # a few big in-flight DMAs for the memcpy path.
_DMA_MIN_CHUNK_BYTES = 1 << 20


def _cdiv(a, b):
    return -(-a // b)


def _round_up(n, m):
    return ((n + m - 1) // m) * m


# ----------------------------------------------------------------------------
# Path 1: pure pass-through as a few large HBM->HBM DMAs (no VMEM bounce).
# ----------------------------------------------------------------------------
def _dma_chunk_bounds(shape, itemsize):
    """Static (start, size) chunks along axis 0 for a handful of big DMAs."""
    lead = shape[0]
    inner_bytes = itemsize
    for d in shape[1:]:
        inner_bytes *= d
    total_bytes = lead * inner_bytes
    n = max(1, min(_DMA_MAX_CHUNKS, lead, total_bytes // _DMA_MIN_CHUNK_BYTES))
    base, rem = divmod(lead, n)
    bounds, start = [], 0
    for i in range(n):
        size = base + (1 if i < rem else 0)
        bounds.append((start, size))
        start += size
    return tuple(bounds)


def _make_dma_copy_kernel(chunk_bounds):
    def kernel(x_hbm, o_hbm, sems):
        copies = []
        for i, (start, size) in enumerate(chunk_bounds):
            cp = pltpu.make_async_copy(
                x_hbm.at[pl.ds(start, size)],
                o_hbm.at[pl.ds(start, size)],
                sems.at[i],
            )
            cp.start()
            copies.append(cp)
        for cp in copies:
            cp.wait()
    return kernel


@jax.jit
def _dma_copy(x):
    chunks = _dma_chunk_bounds(x.shape, x.dtype.itemsize)
    return pl.pallas_call(
        _make_dma_copy_kernel(chunks),
        out_shape=jax.ShapeDtypeStruct(x.shape, x.dtype),
        in_specs=[pl.BlockSpec(memory_space=pl.ANY)],
        out_specs=pl.BlockSpec(memory_space=pl.ANY),
        scratch_shapes=[pltpu.SemaphoreType.DMA((len(chunks),))],
    )(x)


# ----------------------------------------------------------------------------
# Path 2: tiled, lane-dense VMEM pipeline -- the skeleton a concrete Reader
# subclass would fill with real sampling/gather math.  (For data-dependent
# gathers a subclass would move to memory_space=pl.ANY + scalar-prefetched
# indices + manual make_async_copy.)
# ----------------------------------------------------------------------------
def _reader_tile_kernel(x_ref, o_ref):
    # Full-tile copy of the lane-dense (block_rows, 128) block.
    o_ref[...] = x_ref[...]


def _choose_block_rows(rows, itemsize):
    # Dtype-aware sublane multiple: f32 -> 8, bf16 -> 16, int8/fp8 -> 32.
    sublane = max(8, 32 // itemsize)
    # ~2 MiB per block -> >=85% of the copy roofline; double-buffered
    # 2-in + 2-out stays ~8 MiB, well under the 32 MiB vmem limit.
    target_rows = max(sublane, _TARGET_BLOCK_BYTES // (_LANES * itemsize))
    # Keep >= ~4 grid steps so the ("parallel",) axis gives both v7x
    # TensorCores >= 2 steps each.
    quarter_rows = _round_up(_cdiv(rows, 4), sublane)
    return int(max(sublane, min(target_rows, quarter_rows)))


@functools.partial(jax.jit, static_argnames=("block_rows",))
def _tiled_copy(x, *, block_rows):
    orig_shape = x.shape
    rows = x.size // _LANES           # caller guarantees x.size % 128 == 0
    x2d = x.reshape(rows, _LANES)     # inside jit: layout-only, no HBM pass
    grid = (_cdiv(rows, block_rows),)  # partial last block handled by Pallas
    y2d = pl.pallas_call(
        _reader_tile_kernel,
        out_shape=jax.ShapeDtypeStruct((rows, _LANES), x.dtype),
        grid=grid,
        in_specs=[pl.BlockSpec((block_rows, _LANES), lambda i: (i, 0))],
        out_specs=pl.BlockSpec((block_rows, _LANES), lambda i: (i, 0)),
        compiler_params=pltpu.CompilerParams(
            dimension_semantics=("parallel",),
            vmem_limit_bytes=_VMEM_LIMIT_BYTES,
        ),
    )(x2d)
    return y2d.reshape(orig_shape)


# ----------------------------------------------------------------------------
# Wrapper: dispatch between bypass / DMA memcpy / tiled skeleton.
# ----------------------------------------------------------------------------
def reader_passthrough(x, *, force_kernel=False, method="auto"):
    """Run the reader hot path (identity read) as a Pallas TPU kernel.

    method:
      "auto"  -- bypass for small tensors, HBM->HBM DMA memcpy otherwise.
      "dma"   -- force the HBM->HBM DMA path (any shape/dtype).
      "tiled" -- force the tiled VMEM-pipeline skeleton (needs size % 128 == 0,
                 otherwise falls back to "dma" rather than padding).
    """
    if x.ndim == 0 or x.size == 0:
        return x

    nbytes = x.size * x.dtype.itemsize
    if method == "auto" and not force_kernel and nbytes < _SMALL_BYTES:
        # Launch + dispatch cost rivals the copy itself below a few MiB.
        return x

    if method == "auto":
        method = "dma"
    if method == "tiled" and (x.size % _LANES) != 0:
        # No jnp.pad (it would add a full extra HBM pass); DMA handles any shape.
        method = "dma"

    if method == "dma":
        return _dma_copy(x)

    block_rows = _choose_block_rows(x.size // _LANES, x.dtype.itemsize)
    return _tiled_copy(x, block_rows=block_rows)


# ----------------------------------------------------------------------------
# Abstract Reader module (JAX/Pallas flavor)
# ----------------------------------------------------------------------------
@register_reader("abstract_reader")
class Reader:
    """Abstract reader: holds args; forward is not implemented.

    `read` is the Pallas-backed hook a concrete subclass would specialize; the
    abstract base defines no computation, so it is an exact identity.
    """

    def __init__(self, args):
        self.args = args
        # No parameters in the abstract reader's __init__ -> nothing to init.

    def forward(self, **kwargs):
        # Matches PyTorch semantics exactly: the abstract forward raises.
        raise NotImplementedError
        # TODO(synk): concrete Reader subclasses (e.g. image_reader) define the
        # real forward (pixel/ray sampling); only the abstract base was given.

    def read(self, x, *, force_kernel=False, method="auto"):
        """Pallas-backed pass-through used by would-be subclasses."""
        return reader_passthrough(x, force_kernel=force_kernel, method=method)

    @staticmethod
    def add_args(parser):
        pass


# ----------------------------------------------------------------------------
# Demo / smoke test
# ----------------------------------------------------------------------------
if __name__ == "__main__":
    key = jax.random.PRNGKey(0)

    reader = READER_REGISTRY["abstract_reader"](args=None)

    # Abstract forward must raise, exactly like the PyTorch module.
    raised = False
    try:
        reader.forward(x=None)
    except NotImplementedError:
        raised = True
    assert raised, "abstract forward() should raise NotImplementedError"

    # Small NCHW input consistent with what an image reader would consume.
    k1, k2 = jax.random.split(key)
    x_small = jax.random.normal(k1, (2, 4, 16, 16), dtype=jnp.float32)

    # 1) Fast path: tiny tensor -> no kernel launch, exact identity.
    y_fast = jax.block_until_ready(reader.read(x_small))
    assert y_fast.shape == x_small.shape and y_fast.dtype == x_small.dtype
    assert bool(jnp.all(y_fast == x_small))

    # 2) HBM->HBM DMA memcpy path forced on the small input.
    y_dma = jax.block_until_ready(reader.read(x_small, force_kernel=True, method="dma"))
    assert y_dma.shape == x_small.shape and y_dma.dtype == x_small.dtype
    assert bool(jnp.all(y_dma == x_small))

    # 3) Tiled VMEM-pipeline skeleton forced on the small input (2-step grid).
    y_tiled = jax.block_until_ready(reader.read(x_small, force_kernel=True, method="tiled"))
    assert y_tiled.shape == x_small.shape and y_tiled.dtype == x_small.dtype
    assert bool(jnp.all(y_tiled == x_small))

    # 4) Larger tensor exercising the multi-step parallel tiled grid
    #    (2048 lane-dense rows -> 4 grid steps) and the DMA path.
    x_big = jax.random.normal(k2, (8, 4, 64, 128), dtype=jnp.float32)
    y_big = jax.block_until_ready(reader.read(x_big, force_kernel=True, method="tiled"))
    assert y_big.shape == x_big.shape and y_big.dtype == x_big.dtype
    assert bool(jnp.all(y_big == x_big))

    y_big_dma = jax.block_until_ready(reader.read(x_big, force_kernel=True, method="dma"))
    assert bool(jnp.all(y_big_dma == x_big))

    # 5) bf16 input: dtype-aware sublane rounding (16-row multiple) in tiled path.
    x_bf16 = x_big.astype(jnp.bfloat16)
    y_bf16 = jax.block_until_ready(reader.read(x_bf16, force_kernel=True, method="tiled"))
    assert y_bf16.shape == x_bf16.shape and y_bf16.dtype == x_bf16.dtype
    assert bool(jnp.all(y_bf16 == x_bf16))

    print("KERNEL_OK")
</pallas_src>

<mosaic_0001>
module attributes {stable_mosaic.version = 11 : i64} {
  func.func @kernel(%arg0: memref<2x4x16x16xf32, #tpu.memory_space<any>>, %arg1: memref<2x4x16x16xf32, #tpu.memory_space<any>>, %arg2: memref<1x!tpu.dma_semaphore, #tpu.memory_space<semaphore_mem>>) attributes {dimension_semantics = [], scalar_prefetch = 0 : i64, scratch_operands = 1 : i64, tpu.core_type = #tpu.core_type<tc>} {
    %c0_i32 = arith.constant 0 : i32
    %c0_i32_0 = arith.constant 0 : i32
    %c0_i32_1 = arith.constant 0 : i32
    %c0_i32_2 = arith.constant 0 : i32
    %c0_i32_3 = arith.constant 0 : i32
    %0 = tpu.memref_slice %arg0[%c0_i32_0, %c0_i32_1, %c0_i32_2, %c0_i32_3] : memref<2x4x16x16xf32, #tpu.memory_space<any>> -> memref<2x4x16x16xf32, #tpu.memory_space<any>>
    %c0_i32_4 = arith.constant 0 : i32
    %c0_i32_5 = arith.constant 0 : i32
    %c0_i32_6 = arith.constant 0 : i32
    %c0_i32_7 = arith.constant 0 : i32
    %1 = tpu.memref_slice %arg1[%c0_i32_4, %c0_i32_5, %c0_i32_6, %c0_i32_7] : memref<2x4x16x16xf32, #tpu.memory_space<any>> -> memref<2x4x16x16xf32, #tpu.memory_space<any>>
    %2 = tpu.memref_slice %arg2[%c0_i32] : memref<1x!tpu.dma_semaphore, #tpu.memory_space<semaphore_mem>> -> memref<1x!tpu.dma_semaphore, #tpu.memory_space<semaphore_mem>>
    %3 = tpu.memref_squeeze %2 : memref<1x!tpu.dma_semaphore, #tpu.memory_space<semaphore_mem>> -> memref<!tpu.dma_semaphore, #tpu.memory_space<semaphore_mem>>
    tpu.enqueue_dma source(%0 : memref<2x4x16x16xf32, #tpu.memory_space<any>>) target(%1 : memref<2x4x16x16xf32, #tpu.memory_space<any>>) target_semaphore(%3 : memref<!tpu.dma_semaphore, #tpu.memory_space<semaphore_mem>>)
    %c0_i32_8 = arith.constant 0 : i32
    %c0_i32_9 = arith.constant 0 : i32
    %c0_i32_10 = arith.constant 0 : i32
    %c0_i32_11 = arith.constant 0 : i32
    %c0_i32_12 = arith.constant 0 : i32
    %4 = tpu.memref_slice %arg0[%c0_i32_9, %c0_i32_10, %c0_i32_11, %c0_i32_12] : memref<2x4x16x16xf32, #tpu.memory_space<any>> -> memref<2x4x16x16xf32, #tpu.memory_space<any>>
    %c0_i32_13 = arith.constant 0 : i32
    %c0_i32_14 = arith.constant 0 : i32
    %c0_i32_15 = arith.constant 0 : i32
    %c0_i32_16 = arith.constant 0 : i32
    %5 = tpu.memref_slice %arg1[%c0_i32_13, %c0_i32_14, %c0_i32_15, %c0_i32_16] : memref<2x4x16x16xf32, #tpu.memory_space<any>> -> memref<2x4x16x16xf32, #tpu.memory_space<any>>
    %6 = tpu.memref_slice %arg2[%c0_i32_8] : memref<1x!tpu.dma_semaphore, #tpu.memory_space<semaphore_mem>> -> memref<1x!tpu.dma_semaphore, #tpu.memory_space<semaphore_mem>>
    %7 = tpu.memref_squeeze %6 : memref<1x!tpu.dma_semaphore, #tpu.memory_space<semaphore_mem>> -> memref<!tpu.dma_semaphore, #tpu.memory_space<semaphore_mem>>
    tpu.wait_dma2 semaphore(%7 : memref<!tpu.dma_semaphore, #tpu.memory_space<semaphore_mem>>) src(%4 : memref<2x4x16x16xf32, #tpu.memory_space<any>>) dst(%5 : memref<2x4x16x16xf32, #tpu.memory_space<any>>)
    return
  }
}

</mosaic_0001>

<llo_original>
// kernel: _dma_copy.1
$region0: #{_dma_copy.1}
  #allocation0 [shape = 'u32[]', space=smem, size = 0x4, offset = 0x4, fixed_abs, tag = 'smem constant byte address 0x4 - core index']
  #allocation1 [shape = 'u32[144,128]{1,0:T(1,128)}', space=vmem, size = 0x12000, scoped, tag = 'internal scratch']
  #allocation2 [shape = 's32[1]{0}', space=sflag, size = 0x4, scoped, tag = 'scratch operand']
  #allocation3 [shape = 's32[]', space=sflag, size = 0x4, offset = 0, fixed_abs, tag = 'sflag constant byte address 0x0 - dummy sync flag']
  #allocation4 [shape = 'u32[0]{0}', space=smem, size = 0, offset = 0, fixed_abs, tag = 'smem constant byte address 0x0 - null']
  %s0 = inlined_call_operand.hbm [shape: f32[2,4,16,16], index: 0, kind: input, shape index: {}]
  %s1 = inlined_call_operand.hbm [shape: f32[2,4,16,16], index: 1, kind: output, shape index: {}]
  %s2 = sld [smem:[#allocation0]]
  $region2: #{_dma_copy.1} parent=0
    _
  %s4 = ssub.s32 1, %s2
  %s5 = scalar_select 0, %s4, %s2
  %s7 = sshll.u32 1, 14
  %s8 = sxor.u32 4294967295, %s7
  %s11 = sshll.u32 3, 24
  %s12 = sxor.u32 4294967295, %s11
  %s13 = sand.u32 0, %s12
  %s15 = sor.u32 %s13, 0
  %18 = dma.general %s0, 2048, %s1, [#allocation2], [#allocation3], [#allocation4], %s15, 0
  %s19 = smul.u32 2, 4
  %s20 = smul.u32 %s19, 16
  %s21 = smul.u32 %s20, 1
  %s22 = sshll.u32 %s21, 4
  %23 = dma.done [#allocation2], %s22
  %24 = vsyncmov [#allocation2]
  %s25 = vpop.sfrf %24
  %p26 = scmp.eq.s32.totalorder %s25, 0
  %p27 = pneg %p26
  %29 = shalt.err (%p27)

</llo_original>
